<compile_context>
chip_gen: v6e
topology: v6e:2x2x1
jax: 0.10.0
libtpu: 0.0.40
codegen_flags: <defaults>
</compile_context>

<pallas_src>
import functools

import jax
import jax.numpy as jnp
import numpy as np
from jax.experimental import pallas as pl
from jax.experimental.pallas import tpu as pltpu


# ----------------------------- Pallas kernel -------------------------------

def _fused_gcn_pool_mlp_kernel(edge_ref, batch_ref, x_ref, w_ref, vec_ref, o_ref):
    """Edge list -> dedup'd graph-0 adjacency -> GraphConv -> sum-pool -> MLP head.

    edge_ref: (2, E)   int32  rows = [start, end] global node ids (original edge_index layout)
    batch_ref:(N, 1)   int32  graph id of every node (N = batch_size * n_hits)
    x_ref:    (n, d_in) f32   node features of graph 0
    w_ref:    (r0+h, h) f32   rows [0:d_in] = W_gcn@W1 (folded), rows [r0:r0+h] = W2
    vec_ref:  (4, h)    f32   rows = [n*b_gcn@W1 + b1,  b2,  W3^T,  [b3, 0, ...]]
    o_ref:    (1, 1)    f32   final logit
    """
    n_hits, d_in = x_ref.shape
    n_nodes = batch_ref.shape[0]
    hidden = vec_ref.shape[1]
    r0 = ((d_in + 7) // 8) * 8          # 8-aligned sublane offset of W2 inside the weight slab

    edges = edge_ref[...]
    start_r = edges[0:1, :]             # (1, E)
    end_r = edges[1:2, :]               # (1, E)

    node_ids = jax.lax.broadcasted_iota(jnp.int32, (n_nodes, 1), 0)   # (N, 1)
    hit_ids = jax.lax.broadcasted_iota(jnp.int32, (n_hits, 1), 0)     # (n, 1)

    # One-hot "scatter" of the edge list via VPU compares (replaces the old host-side
    # sort-based jnp.unique + scatter-add; everything stays in vregs).
    oh_start = jnp.where(node_ids == start_r, 1.0, 0.0)               # (N, E)
    oh_end = jnp.where(hit_ids == end_r, 1.0, 0.0)                    # (n, E)

    # Edge e lands in graph 0's adjacency iff batch[start[e]] == 0.
    g0_node = jnp.where(batch_ref[...] == 0, 1.0, 0.0)                # (N, 1)
    is_g0 = jnp.sum(oh_start * g0_node, axis=0, keepdims=True)        # (1, E)

    # Dense graph-0 adjacency, vreg-resident only.  counts[s, j] = #edges s->j in graph 0;
    # min(., 1) reproduces `A[...] = 1` (duplicate edges collapse to a single 1).
    counts = jax.lax.dot_general(
        oh_start[:n_hits, :] * is_g0, oh_end,
        (((1,), (1,)), ((), ())), preferred_element_type=jnp.float32)  # (n, n)
    adj0 = jnp.minimum(counts, 1.0)
    deg = jnp.sum(adj0, axis=0, keepdims=True)                         # (1, n) = colsum(A[0])

    # sum_nodes((A @ x) @ W + b) == (colsum(A) @ x) @ W + n_hits * b; W_gcn/b_gcn were folded
    # into the first MLP layer offline, so only (deg @ x) is computed here.
    pooled = jnp.dot(deg, x_ref[...], preferred_element_type=jnp.float32)   # (1, d_in)

    w = w_ref[...]
    vec = vec_ref[...]
    wf1 = w[0:d_in, :]             # W_gcn @ W1                     (d_in, h)
    w2 = w[r0:r0 + hidden, :]      # W2                             (h, h)
    bf1 = vec[0:1, :]              # n_hits * b_gcn @ W1 + b1       (1, h)
    b2 = vec[1:2, :]               # b2                             (1, h)
    w3_row = vec[2:3, :]           # W3^T                           (1, h)
    b3 = vec[3:4, 0:1]             # b3                             (1, 1)

    h = jnp.tanh(jnp.dot(pooled, wf1, preferred_element_type=jnp.float32) + bf1)
    h = jnp.tanh(jnp.dot(h, w2, preferred_element_type=jnp.float32) + b2)
    # Final (1,h)@(h,1) as a VPU broadcast-multiply + lane reduce (skips one MXU round trip).
    o_ref[...] = jnp.sum(h * w3_row, axis=1, keepdims=True) + b3


# ----------------------------- wrappers -------------------------------------

def pack_params(params, n_hits):
    """Fold W_gcn/b_gcn into the first MLP layer and pack all weights/biases into two
    lane-dense slabs.  Done ONCE at init, not per forward call."""
    W_gcn = params["W_gcn"].astype(jnp.float32)
    W1 = params["W1"].astype(jnp.float32)
    d_in, hidden = W_gcn.shape
    r0 = ((d_in + 7) // 8) * 8
    wf1 = W_gcn @ W1                                                       # (d_in, hidden)
    bf1 = jnp.float32(n_hits) * (params["b_gcn"] @ W1) + params["b1"]      # (hidden,)

    w_slab = jnp.zeros((r0 + hidden, hidden), jnp.float32)
    w_slab = w_slab.at[:d_in, :].set(wf1)
    w_slab = w_slab.at[r0:r0 + hidden, :].set(params["W2"].astype(jnp.float32))

    vec_slab = jnp.zeros((4, hidden), jnp.float32)
    vec_slab = vec_slab.at[0, :].set(bf1)
    vec_slab = vec_slab.at[1, :].set(params["b2"].astype(jnp.float32))
    vec_slab = vec_slab.at[2, :].set(params["W3"].astype(jnp.float32)[:, 0])
    vec_slab = vec_slab.at[3, 0].set(params["b3"].astype(jnp.float32)[0])
    return {"w_slab": w_slab, "vec_slab": vec_slab}


@functools.partial(jax.jit, static_argnames=("batch_size",))
def graph_conv_pooling_forward(x, edge_index, batch, packed, *, batch_size):
    """GraphConvPooling.forward (is_e=False, agg='sum') — one pallas_call inside one jit."""
    n_hits = x.shape[0] // batch_size
    x0 = x[:n_hits].astype(jnp.float32)                     # only graph 0 feeds the output
    edges = edge_index.astype(jnp.int32)                    # (2, E)
    batch_col = batch.astype(jnp.int32).reshape(-1, 1)      # (N, 1)

    vmem = pl.BlockSpec(memory_space=pltpu.MemorySpace.VMEM)
    out = pl.pallas_call(
        _fused_gcn_pool_mlp_kernel,
        out_shape=jax.ShapeDtypeStruct((1, 1), jnp.float32),
        in_specs=[vmem] * 5,
        out_specs=vmem,
    )(edges, batch_col, x0, packed["w_slab"], packed["vec_slab"])
    return out.reshape(1)                                    # shape [1], like PyTorch


# ----------------------------- reference (plain JAX, dense path) ------------

def build_adjacency(edge_index, batch, batch_size, n_hits):
    """Dense per-graph adjacency, identical to the PyTorch scatter (is_e=False).
    Used ONLY by the reference check — the kernel path keeps A[0] in vregs."""
    start, end = edge_index
    b = batch[start]
    A = jnp.zeros((batch_size, n_hits, n_hits), jnp.float32)
    return A.at[b, start - n_hits * b, end - n_hits * b].set(1.0)


def reference_forward(x, edge_index, batch, batch_size, params):
    n_hits = x.shape[0] // batch_size
    nodes = x.reshape(batch_size, n_hits, x.shape[1])
    A = build_adjacency(edge_index, batch, batch_size, n_hits)
    h = jnp.matmul(jnp.matmul(A, nodes), params["W_gcn"]) + params["b_gcn"]
    pooled = jnp.sum(h, axis=1)[0]
    z = jnp.tanh(pooled @ params["W1"] + params["b1"])
    z = jnp.tanh(z @ params["W2"] + params["b2"])
    return (z @ params["W3"] + params["b3"]).reshape(1)


# ----------------------------- main ------------------------------------------

if __name__ == "__main__":
    B = 2            # batch_size
    n_hits = 16      # nodes per graph
    d_in = 8         # GraphConv input_dim
    hidden = 32      # GraphConv output_dim == MLP hidden_dim
    E = 40           # number of (unique) edges

    key = jax.random.PRNGKey(0)
    kx, ks, ke, k0, k1, k2, k3, k4, k5, k6 = jax.random.split(key, 10)

    # inputs
    x = jax.random.normal(kx, (B * n_hits, d_in), jnp.float32)
    start = jax.random.randint(ks, (E,), 0, B * n_hits)
    local_end = jax.random.randint(ke, (E,), 0, n_hits)
    end = (start // n_hits) * n_hits + local_end      # edges stay within their graph
    edge_index = jnp.stack([start, end]).astype(jnp.int32)
    # intentionally duplicate a few edges: A[...] = 1 collapses duplicates, and so must we
    edge_index = jnp.concatenate([edge_index, edge_index[:, :5]], axis=1)
    batch = jnp.repeat(jnp.arange(B, dtype=jnp.int32), n_hits)

    # deterministic parameter init (original PyTorch leaves the GCN weight uninitialized;
    # here we use small random values for a well-defined synthetic check)
    params = {
        "W_gcn": jax.random.normal(k0, (d_in, hidden), jnp.float32) / np.sqrt(d_in),
        "b_gcn": jax.random.normal(k1, (hidden,), jnp.float32) * 0.1,
        "W1": jax.random.normal(k2, (hidden, hidden), jnp.float32) / np.sqrt(hidden),
        "b1": jax.random.normal(k3, (hidden,), jnp.float32) * 0.1,
        "W2": jax.random.normal(k4, (hidden, hidden), jnp.float32) / np.sqrt(hidden),
        "b2": jax.random.normal(k5, (hidden,), jnp.float32) * 0.1,
        "W3": jax.random.normal(k6, (hidden, 1), jnp.float32) / np.sqrt(hidden),
        "b3": jnp.zeros((1,), jnp.float32),
    }
    packed = jax.tree_util.tree_map(jax.block_until_ready,
                                    pack_params(params, n_hits))   # packed once at init

    out = jax.block_until_ready(
        graph_conv_pooling_forward(x, edge_index, batch, packed, batch_size=B))
    ref = jax.block_until_ready(
        reference_forward(x, edge_index, batch, B, params))

    assert out.shape == (1,), out.shape
    assert jnp.allclose(out, ref, atol=2e-4, rtol=2e-4), (out, ref)
    print("KERNEL_OK")
</pallas_src>

<mosaic_0001>
module attributes {stable_mosaic.version = 11 : i64} {
  func.func @_fused_gcn_pool_mlp_kernel(%arg0: memref<2x45xi32, #tpu.memory_space<vmem>>, %arg1: memref<32x1xi32, #tpu.memory_space<vmem>>, %arg2: memref<16x8xf32, #tpu.memory_space<vmem>>, %arg3: memref<40x32xf32, #tpu.memory_space<vmem>>, %arg4: memref<4x32xf32, #tpu.memory_space<vmem>>, %arg5: memref<1x1xf32, #tpu.memory_space<vmem>>) attributes {dimension_semantics = [], scalar_prefetch = 0 : i64, scratch_operands = 0 : i64, tpu.core_type = #tpu.core_type<tc>} {
    %c0 = arith.constant 0 : index
    %c0_0 = arith.constant 0 : index
    %0 = vector.load %arg0[%c0, %c0_0] : memref<2x45xi32, #tpu.memory_space<vmem>>, vector<2x45xi32>
    %1 = vector.extract_strided_slice %0 {offsets = [0, 0], sizes = [1, 45], strides = [1, 1]} : vector<2x45xi32> to vector<1x45xi32>
    %2 = vector.extract_strided_slice %0 {offsets = [1, 0], sizes = [1, 45], strides = [1, 1]} : vector<2x45xi32> to vector<1x45xi32>
    %3 = tpu.iota {dimensions = array<i32: 0>} : vector<32x1xi32>
    %4 = tpu.iota {dimensions = array<i32: 0>} : vector<16x1xi32>
    %5 = vector.broadcast %3 : vector<32x1xi32> to vector<32x45xi32>
    %6 = vector.broadcast %1 : vector<1x45xi32> to vector<32x45xi32>
    %7 = arith.cmpi eq, %5, %6 : vector<32x45xi32>
    %cst = arith.constant 1.000000e+00 : f32
    %cst_1 = arith.constant 0.000000e+00 : f32
    %8 = vector.broadcast %cst : f32 to vector<32x45xf32>
    %9 = vector.broadcast %cst_1 : f32 to vector<32x45xf32>
    %10 = arith.select %7, %8, %9 : vector<32x45xi1>, vector<32x45xf32>
    %11 = vector.broadcast %4 : vector<16x1xi32> to vector<16x45xi32>
    %12 = vector.broadcast %2 : vector<1x45xi32> to vector<16x45xi32>
    %13 = arith.cmpi eq, %11, %12 : vector<16x45xi32>
    %cst_2 = arith.constant 1.000000e+00 : f32
    %cst_3 = arith.constant 0.000000e+00 : f32
    %14 = vector.broadcast %cst_2 : f32 to vector<16x45xf32>
    %15 = vector.broadcast %cst_3 : f32 to vector<16x45xf32>
    %16 = arith.select %13, %14, %15 : vector<16x45xi1>, vector<16x45xf32>
    %c0_4 = arith.constant 0 : index
    %c0_5 = arith.constant 0 : index
    %17 = vector.load %arg1[%c0_4, %c0_5] : memref<32x1xi32, #tpu.memory_space<vmem>>, vector<32x1xi32>
    %c0_i32 = arith.constant 0 : i32
    %18 = vector.broadcast %c0_i32 : i32 to vector<32x1xi32>
    %19 = arith.cmpi eq, %17, %18 : vector<32x1xi32>
    %cst_6 = arith.constant 1.000000e+00 : f32
    %cst_7 = arith.constant 0.000000e+00 : f32
    %20 = vector.broadcast %cst_6 : f32 to vector<32x1xf32>
    %21 = vector.broadcast %cst_7 : f32 to vector<32x1xf32>
    %22 = arith.select %19, %20, %21 : vector<32x1xi1>, vector<32x1xf32>
    %23 = vector.broadcast %22 : vector<32x1xf32> to vector<32x45xf32>
    %24 = arith.mulf %10, %23 : vector<32x45xf32>
    %cst_8 = arith.constant dense<0.000000e+00> : vector<45xf32>
    %25 = vector.multi_reduction <add>, %24, %cst_8 [0] : vector<32x45xf32> to vector<45xf32>
    %26 = vector.shape_cast %25 : vector<45xf32> to vector<1x45xf32>
    %27 = vector.extract_strided_slice %10 {offsets = [0, 0], sizes = [16, 45], strides = [1, 1]} : vector<32x45xf32> to vector<16x45xf32>
    %28 = vector.broadcast %26 : vector<1x45xf32> to vector<16x45xf32>
    %29 = arith.mulf %27, %28 : vector<16x45xf32>
    %cst_9 = arith.constant dense<0.000000e+00> : vector<16x16xf32>
    %30 = tpu.matmul %29, %16, %cst_9 {dimension_numbers = #tpu.dot_dimension_numbers<[1], [1], [0], [0], [0, 0, 1, 0], [], []>} : vector<16x45xf32>, vector<16x45xf32>, vector<16x16xf32> -> vector<16x16xf32>
    %cst_10 = arith.constant 1.000000e+00 : f32
    %31 = vector.broadcast %cst_10 : f32 to vector<16x16xf32>
    %32 = arith.minimumf %30, %31 : vector<16x16xf32>
    %cst_11 = arith.constant dense<0.000000e+00> : vector<16xf32>
    %33 = vector.multi_reduction <add>, %32, %cst_11 [0] : vector<16x16xf32> to vector<16xf32>
    %34 = vector.shape_cast %33 : vector<16xf32> to vector<1x16xf32>
    %c0_12 = arith.constant 0 : index
    %c0_13 = arith.constant 0 : index
    %35 = vector.load %arg2[%c0_12, %c0_13] : memref<16x8xf32, #tpu.memory_space<vmem>>, vector<16x8xf32>
    %cst_14 = arith.constant dense<0.000000e+00> : vector<1x8xf32>
    %36 = tpu.matmul %34, %35, %cst_14 {dimension_numbers = #tpu.dot_dimension_numbers<[1], [0], [0], [1], [0, 0, 1, 1], [], []>} : vector<1x16xf32>, vector<16x8xf32>, vector<1x8xf32> -> vector<1x8xf32>
    %c0_15 = arith.constant 0 : index
    %c0_16 = arith.constant 0 : index
    %37 = vector.load %arg3[%c0_15, %c0_16] : memref<40x32xf32, #tpu.memory_space<vmem>>, vector<40x32xf32>
    %c0_17 = arith.constant 0 : index
    %c0_18 = arith.constant 0 : index
    %38 = vector.load %arg4[%c0_17, %c0_18] : memref<4x32xf32, #tpu.memory_space<vmem>>, vector<4x32xf32>
    %39 = vector.extract_strided_slice %37 {offsets = [0, 0], sizes = [8, 32], strides = [1, 1]} : vector<40x32xf32> to vector<8x32xf32>
    %40 = vector.extract_strided_slice %37 {offsets = [8, 0], sizes = [32, 32], strides = [1, 1]} : vector<40x32xf32> to vector<32x32xf32>
    %41 = vector.extract_strided_slice %38 {offsets = [0, 0], sizes = [1, 32], strides = [1, 1]} : vector<4x32xf32> to vector<1x32xf32>
    %42 = vector.extract_strided_slice %38 {offsets = [1, 0], sizes = [1, 32], strides = [1, 1]} : vector<4x32xf32> to vector<1x32xf32>
    %43 = vector.extract_strided_slice %38 {offsets = [2, 0], sizes = [1, 32], strides = [1, 1]} : vector<4x32xf32> to vector<1x32xf32>
    %44 = vector.extract_strided_slice %38 {offsets = [3, 0], sizes = [1, 1], strides = [1, 1]} : vector<4x32xf32> to vector<1x1xf32>
    %cst_19 = arith.constant dense<0.000000e+00> : vector<1x32xf32>
    %45 = tpu.matmul %36, %39, %cst_19 {dimension_numbers = #tpu.dot_dimension_numbers<[1], [0], [0], [1], [0, 0, 1, 1], [], []>} : vector<1x8xf32>, vector<8x32xf32>, vector<1x32xf32> -> vector<1x32xf32>
    %46 = arith.addf %45, %41 : vector<1x32xf32>
    %47 = math.tanh %46 : vector<1x32xf32>
    %cst_20 = arith.constant dense<0.000000e+00> : vector<1x32xf32>
    %48 = tpu.matmul %47, %40, %cst_20 {dimension_numbers = #tpu.dot_dimension_numbers<[1], [0], [0], [1], [0, 0, 1, 1], [], []>} : vector<1x32xf32>, vector<32x32xf32>, vector<1x32xf32> -> vector<1x32xf32>
    %49 = arith.addf %48, %42 : vector<1x32xf32>
    %50 = math.tanh %49 : vector<1x32xf32>
    %51 = arith.mulf %50, %43 : vector<1x32xf32>
    %cst_21 = arith.constant dense<0.000000e+00> : vector<1xf32>
    %52 = vector.multi_reduction <add>, %51, %cst_21 [1] : vector<1x32xf32> to vector<1xf32>
    %53 = vector.shape_cast %52 : vector<1xf32> to vector<1x1xf32>
    %54 = arith.addf %53, %44 : vector<1x1xf32>
    %c0_22 = arith.constant 0 : index
    %c0_23 = arith.constant 0 : index
    %55 = vector.load %arg5[%c0_22, %c0_23] : memref<1x1xf32, #tpu.memory_space<vmem>>, vector<1x1xf32>
    tpu.vector_store %arg5[%c0_22, %c0_23], %54 {strides = array<i32>} : memref<1x1xf32, #tpu.memory_space<vmem>>, vector<1x1xf32>,
    return
  }
}

</mosaic_0001>

<llo_original>
// kernel: graph_conv_pooling_forward.1
$region0: #{graph_conv_pooling_forward.1}
  #allocation0 [shape = 'u32[]', space=smem, size = 0x4, offset = 0x4, fixed_abs, tag = 'smem constant byte address 0x4 - core index']
  #allocation1 [shape = 'u32[144,128]{1,0:T(1,128)}', space=vmem, size = 0x12000, scoped, tag = 'internal scratch']
  %s0 = inlined_call_operand.vmem [shape: s32[2,45], index: 0, kind: input, shape index: {}]
  %s1 = inlined_call_operand.vmem [shape: s32[32,1], index: 1, kind: input, shape index: {}]
  %s2 = inlined_call_operand.vmem [shape: f32[16,8], index: 2, kind: input, shape index: {}]
  %s3 = inlined_call_operand.vmem [shape: f32[40,32], index: 3, kind: input, shape index: {}]
  %s4 = inlined_call_operand.vmem [shape: f32[4,32], index: 4, kind: input, shape index: {}]
  %s5 = inlined_call_operand.hbm [shape: f32[1,1], index: 5, kind: output, shape index: {}]
  %s6 = sld [smem:[#allocation0]]
  $region30: #{graph_conv_pooling_forward.1} parent=0
    _
  %s8 = ssub.s32 1, %s6
  %s9 = scalar_select 0, %s8, %s6
  $region1: #{graph_conv_pooling_forward.1} parent=0
    #allocation2 [shape = 'u8[512]{0}', space=vmem, size = 0x400, scoped, tag = 'output window, operand 0, single buffered']
    #allocation3 [shape = 's32[1]{0}', space=sflag, size = 0x4, scoped, tag = 'scoped memory for graph_conv_pooling_forward.1']
    %10 = vsyncpa [#allocation3], 0
    // Predicated region
    $region2: #{graph_conv_pooling_forward.1} parent=1 // pred_check
      _
    $region3: #{graph_conv_pooling_forward.1} parent=1 // pred_check_branch
      %12 = sbr.rel (0) target = $region5
    $region4: #{graph_conv_pooling_forward.1} parent=1 // pred_region
      _
    $region5: #{graph_conv_pooling_forward.1} parent=1 // pred_fallthru
      _
    // Predicated region
    $region6: #{graph_conv_pooling_forward.1} parent=1 // pred_check
      _
    $region7: #{graph_conv_pooling_forward.1} parent=1 // pred_check_branch
      %14 = sbr.rel (0) target = $region9
    $region8: #{graph_conv_pooling_forward.1} parent=1 // pred_region
      _
    $region9: #{graph_conv_pooling_forward.1} parent=1 // pred_fallthru
      _
    // Predicated region
    $region10: #{graph_conv_pooling_forward.1} parent=1 // pred_check
      _
    $region11: #{graph_conv_pooling_forward.1} parent=1 // pred_check_branch
      %16 = sbr.rel (0) target = $region13
    $region12: #{graph_conv_pooling_forward.1} parent=1 // pred_region
      _
    $region13: #{graph_conv_pooling_forward.1} parent=1 // pred_fallthru
      _
    // Predicated region
    $region14: #{graph_conv_pooling_forward.1} parent=1 // pred_check
      _
    $region15: #{graph_conv_pooling_forward.1} parent=1 // pred_check_branch
      %18 = sbr.rel (0) target = $region17
    $region16: #{graph_conv_pooling_forward.1} parent=1 // pred_region
      _
    $region17: #{graph_conv_pooling_forward.1} parent=1 // pred_fallthru
      _
    // Predicated region
    $region18: #{graph_conv_pooling_forward.1} parent=1 // pred_check
      _
    $region19: #{graph_conv_pooling_forward.1} parent=1 // pred_check_branch
      %20 = sbr.rel (0) target = $region21
    $region20: #{graph_conv_pooling_forward.1} parent=1 // pred_region
      _
    $region21: #{graph_conv_pooling_forward.1} parent=1 // pred_fallthru
      _
    %v21 = vld [vmem:[%s0] sm:$0x3]
    %v22 = vlaneseq
    %v23 = vshrl.u32 %v22, 7
    %v24 = vadd.s32 %v23, 8
    %v25 = vadd.s32 %v23, 16
    %v26 = vadd.s32 %v23, 24
    %v27 = vlaneseq
    %v28 = vshrl.u32 %v27, 7
    %v29 = vsub.s32 0, %v28
    %v30 = vrot.slane %v21, %v29
    %vm31 = vcmp.eq.s32.totalorder %v23, %v30
    %vm32 = vcmp.eq.s32.totalorder %v24, %v30
    %vm33 = vcmp.eq.s32.totalorder %v25, %v30
    %vm34 = vcmp.eq.s32.totalorder %v26, %v30
    %v35 = vsel %vm31, 1.0, 0.0
    %v36 = vsel %vm32, 1.0, 0.0
    %v37 = vsel %vm33, 1.0, 0.0
    %v38 = vsel %vm34, 1.0, 0.0
    %v39 = vlaneseq
    %v40 = vshrl.u32 %v39, 7
    %v41 = vsub.s32 1, %v40
    %v42 = vrot.slane %v21, %v41
    %vm43 = vcmp.eq.s32.totalorder %v23, %v42
    %vm44 = vcmp.eq.s32.totalorder %v24, %v42
    %v45 = vsel %vm43, 1.0, 0.0
    %v46 = vsel %vm44, 1.0, 0.0
    %v47 = vld [vmem:[%s1] sm:$0xff]
    %v48 = vld [vmem:[%s1 + $0x8] sm:$0xff]
    %v49 = vld [vmem:[%s1 + $0x10] sm:$0xff]
    %v50 = vld [vmem:[%s1 + $0x18] sm:$0xff]
    %vm51 = vcmp.eq.s32.totalorder %v47, 0
    %vm52 = vcmp.eq.s32.totalorder %v48, 0
    %vm53 = vcmp.eq.s32.totalorder %v49, 0
    %vm54 = vcmp.eq.s32.totalorder %v50, 0
    %v55 = vsel %vm51, 1.0, 0.0
    %v56 = vsel %vm52, 1.0, 0.0
    %v57 = vsel %vm53, 1.0, 0.0
    %v58 = vsel %vm54, 1.0, 0.0
    %60 = vset.pattern.permute.xlu0 0
    %61 = vperm.xlu0 %60, %v55
    %v62 = vpop.permute.xlu0 %61
    %65 = vset.pattern.permute.xlu0 0
    %66 = vperm.xlu0 %65, %v56
    %v67 = vpop.permute.xlu0 %66
    %70 = vset.pattern.permute.xlu0 0
    %71 = vperm.xlu0 %70, %v57
    %v72 = vpop.permute.xlu0 %71
    %75 = vset.pattern.permute.xlu0 0
    %76 = vperm.xlu0 %75, %v58
    %v77 = vpop.permute.xlu0 %76
    %v79 = vmul.f32 %v35, %v62
    %v80 = vmul.f32 %v36, %v67
    %v81 = vmul.f32 %v37, %v72
    %v82 = vmul.f32 %v38, %v77
    %vm83 = vcmask 367616
    %v84 = vsel %vm83, %v79, 0.0
    %v85 = vsel %vm83, %v80, 0.0
    %v86 = vadd.f32 %v84, %v85
    %v87 = vsel %vm83, %v81, 0.0
    %v88 = vadd.f32 %v86, %v87
    %v89 = vsel %vm83, %v82, 0.0
    %v90 = vadd.f32 %v88, %v89
    %v91 = vrot.slane %v90, 4
    %v92 = vadd.f32 %v90, %v91
    %v93 = vrot.slane %v92, 2
    %v94 = vadd.f32 %v92, %v93
    %v95 = vrot.slane %v94, 1
    %v96 = vadd.f32 %v94, %v95
    %v97 = vmul.f32 %v35, %v96
    %v98 = vmul.f32 %v36, %v96
    %v100 = vsel %vm83, %v97, 0
    %v103 = vsel %vm83, %v98, 0
    %v106 = vsel %vm83, %v45, 0
    %v109 = vsel %vm83, %v46, 0
    %111 = vmatprep.subr.mxu0 0.0
    %112 = vmatpush1.xpose.msra.mxu0 0.0
    %113 = vmatprep.subr.mxu0 0.0
    %114 = vmatpush1.xpose.msra.mxu0 0.0
    %115 = vmatprep.subr.mxu0 0.0
    %116 = vmatpush1.xpose.msra.mxu0 0.0
    %117 = vmatprep.subr.mxu0 0.0
    %118 = vmatpush1.xpose.msra.mxu0 0.0
    %119 = vmatprep.subr.mxu0 0.0
    %120 = vmatpush1.xpose.msra.mxu0 0.0
    %121 = vmatprep.subr.mxu0 0.0
    %122 = vmatpush1.xpose.msra.mxu0 0.0
    %123 = vmatprep.subr.mxu0 0.0
    %124 = vmatpush1.xpose.msra.mxu0 0.0
    %125 = vmatprep.subr.mxu0 0.0
    %126 = vmatpush1.xpose.msra.mxu0 0.0
    %127 = vmatprep.subr.mxu0 0.0
    %128 = vmatpush1.xpose.msra.mxu0 0.0
    %129 = vmatprep.subr.mxu0 0.0
    %130 = vmatpush1.xpose.msra.mxu0 0.0
    %131 = vmatprep.subr.mxu0 0.0
    %132 = vmatpush1.xpose.msra.mxu0 0.0
    %133 = vmatprep.subr.mxu0 0.0
    %134 = vmatpush1.xpose.msra.mxu0 0.0
    %135 = vmatprep.subr.mxu0 0.0
    %136 = vmatpush1.xpose.msra.mxu0 0.0
    %137 = vmatprep.subr.mxu0 0.0
    %138 = vmatpush1.xpose.msra.mxu0 0.0
    %139 = vmatprep.subr.mxu0 0.0
    %140 = vmatpush1.xpose.msra.mxu0 %v109
    %141 = vmatprep.subr.mxu0 0.0
    %142 = vmatpush1.xpose.msra.mxu0 %v106
    %143 = vmatprep.subr.mxu0 0.0
    %144 = vmatpush2.xpose.msra.mxu0 0.0
    %145 = vmatprep.subr.mxu0 0.0
    %146 = vmatpush2.xpose.msra.mxu0 0.0
    %147 = vmatprep.subr.mxu0 0.0
    %148 = vmatpush2.xpose.msra.mxu0 0.0
    %149 = vmatprep.subr.mxu0 0.0
    %150 = vmatpush2.xpose.msra.mxu0 0.0
    %151 = vmatprep.subr.mxu0 0.0
    %152 = vmatpush2.xpose.msra.mxu0 0.0
    %153 = vmatprep.subr.mxu0 0.0
    %154 = vmatpush2.xpose.msra.mxu0 0.0
    %155 = vmatprep.subr.mxu0 0.0
    %156 = vmatpush2.xpose.msra.mxu0 0.0
    %157 = vmatprep.subr.mxu0 0.0
    %158 = vmatpush2.xpose.msra.mxu0 0.0
    %159 = vmatprep.subr.mxu0 0.0
    %160 = vmatpush2.xpose.msra.mxu0 0.0
    %161 = vmatprep.subr.mxu0 0.0
    %162 = vmatpush2.xpose.msra.mxu0 0.0
    %163 = vmatprep.subr.mxu0 0.0
    %164 = vmatpush2.xpose.msra.mxu0 0.0
    %165 = vmatprep.subr.mxu0 0.0
    %166 = vmatpush2.xpose.msra.mxu0 0.0
    %167 = vmatprep.subr.mxu0 0.0
    %168 = vmatpush2.xpose.msra.mxu0 0.0
    %169 = vmatprep.subr.mxu0 0.0
    %170 = vmatpush2.xpose.msra.mxu0 0.0
    %171 = vmatprep.subr.mxu0 0.0
    %172 = vmatpush2.xpose.msra.mxu0 0.0
    %173 = vmatprep.subr.mxu0 0.0
    %174 = vmatpush2.xpose.msra.mxu0 0.0
    %175 = vmatprep.mubr.f32.mxu0 0.0
    %176 = vmatmul.mubr.f32.gmra.mxu0 %v100
    %v177 = vpop.f32.mrf.mxu0
    %v178 = vadd.f32 0.0, %v177
    %v179 = vpop.f32.mrf.mxu0
    %180 = vmatprep.mubr.f32.mxu0 0.0
    %181 = vmatmul.mubr.f32.gmra.mxu0 %v103
    %v182 = vpop.f32.mrf.mxu0
    %v183 = vadd.f32 0.0, %v182
    %v184 = vpop.f32.mrf.mxu0
    %185 = vdwg.mxu0
    %v186 = vmin.f32 %v178, 1.0
    %v187 = vmin.f32 %v183, 1.0
    %vm188 = vcmask 130048
    %v189 = vsel %vm188, %v186, 0.0
    %v190 = vsel %vm188, %v187, 0.0
    %v191 = vadd.f32 %v189, %v190
    %v192 = vrot.slane %v191, 4
    %v193 = vadd.f32 %v191, %v192
    %v194 = vrot.slane %v193, 2
    %v195 = vadd.f32 %v193, %v194
    %v196 = vrot.slane %v195, 1
    %v197 = vadd.f32 %v195, %v196
    %v198 = vld [vmem:[%s2] sm:$0xff]
    %v199 = vld [vmem:[%s2 + $0x8] sm:$0xff]
    %v201 = vsel %vm188, %v197, 0
    %203 = vmatprep.subr.mxu0 0.0
    %204 = vmatpush1.msra.mxu0 0.0
    %205 = vmatprep.subr.mxu0 0.0
    %206 = vmatpush1.msra.mxu0 0.0
    %207 = vmatprep.subr.mxu0 0.0
    %208 = vmatpush1.msra.mxu0 0.0
    %209 = vmatprep.subr.mxu0 0.0
    %210 = vmatpush1.msra.mxu0 0.0
    %211 = vmatprep.subr.mxu0 0.0
    %212 = vmatpush1.msra.mxu0 0.0
    %213 = vmatprep.subr.mxu0 0.0
    %214 = vmatpush1.msra.mxu0 0.0
    %215 = vmatprep.subr.mxu0 0.0
    %216 = vmatpush1.msra.mxu0 0.0
    %217 = vmatprep.subr.mxu0 0.0
    %218 = vmatpush1.msra.mxu0 0.0
    %219 = vmatprep.subr.mxu0 0.0
    %220 = vmatpush1.msra.mxu0 0.0
    %221 = vmatprep.subr.mxu0 0.0
    %222 = vmatpush1.msra.mxu0 0.0
    %223 = vmatprep.subr.mxu0 0.0
    %224 = vmatpush1.msra.mxu0 0.0
    %225 = vmatprep.subr.mxu0 0.0
    %226 = vmatpush1.msra.mxu0 0.0
    %227 = vmatprep.subr.mxu0 0.0
    %228 = vmatpush1.msra.mxu0 0.0
    %229 = vmatprep.subr.mxu0 0.0
    %230 = vmatpush1.msra.mxu0 0.0
    %231 = vmatprep.subr.mxu0 0.0
    %232 = vmatpush1.msra.mxu0 %v199
    %233 = vmatprep.subr.mxu0 0.0
    %234 = vmatpush1.msra.mxu0 %v198
    %235 = vmatprep.subr.mxu0 0.0
    %236 = vmatpush2.msra.mxu0 0.0
    %237 = vmatprep.subr.mxu0 0.0
    %238 = vmatpush2.msra.mxu0 0.0
    %239 = vmatprep.subr.mxu0 0.0
    %240 = vmatpush2.msra.mxu0 0.0
    %241 = vmatprep.subr.mxu0 0.0
    %242 = vmatpush2.msra.mxu0 0.0
    %243 = vmatprep.subr.mxu0 0.0
    %244 = vmatpush2.msra.mxu0 0.0
    %245 = vmatprep.subr.mxu0 0.0
    %246 = vmatpush2.msra.mxu0 0.0
    %247 = vmatprep.subr.mxu0 0.0
    %248 = vmatpush2.msra.mxu0 0.0
    %249 = vmatprep.subr.mxu0 0.0
    %250 = vmatpush2.msra.mxu0 0.0
    %251 = vmatprep.subr.mxu0 0.0
    %252 = vmatpush2.msra.mxu0 0.0
    %253 = vmatprep.subr.mxu0 0.0
    %254 = vmatpush2.msra.mxu0 0.0
    %255 = vmatprep.subr.mxu0 0.0
    %256 = vmatpush2.msra.mxu0 0.0
    %257 = vmatprep.subr.mxu0 0.0
    %258 = vmatpush2.msra.mxu0 0.0
    %259 = vmatprep.subr.mxu0 0.0
    %260 = vmatpush2.msra.mxu0 0.0
    %261 = vmatprep.subr.mxu0 0.0
    %262 = vmatpush2.msra.mxu0 0.0
    %263 = vmatprep.subr.mxu0 0.0
    %264 = vmatpush2.msra.mxu0 0.0
    %265 = vmatprep.subr.mxu0 0.0
    %266 = vmatpush2.msra.mxu0 0.0
    %267 = vmatprep.mubr.f32.mxu0 0.0
    %268 = vmatmul.mubr.f32.gmra.mxu0 %v201
    %v269 = vpop.f32.mrf.mxu0
    %v270 = vadd.f32 0.0, %v269
    %v271 = vpop.f32.mrf.mxu0
    %272 = vdwg.mxu0
    %v273 = vld [vmem:[%s3] sm:$0xff]
    %v274 = vld [vmem:[%s3 + $0x8] sm:$0xff]
    %v275 = vld [vmem:[%s3 + $0x10] sm:$0xff]
    %v276 = vld [vmem:[%s3 + $0x18] sm:$0xff]
    %v277 = vld [vmem:[%s3 + $0x20] sm:$0xff]
    %v278 = vld [vmem:[%s4] sm:$0xf]
    %vm279 = vcmask 64512
    %v281 = vsel %vm279, %v270, 0
    %283 = vmatprep.subr.mxu0 0.0
    %284 = vmatpush1.msra.mxu0 0.0
    %285 = vmatprep.subr.mxu0 0.0
    %286 = vmatpush1.msra.mxu0 0.0
    %287 = vmatprep.subr.mxu0 0.0
    %288 = vmatpush1.msra.mxu0 0.0
    %289 = vmatprep.subr.mxu0 0.0
    %290 = vmatpush1.msra.mxu0 0.0
    %291 = vmatprep.subr.mxu0 0.0
    %292 = vmatpush1.msra.mxu0 0.0
    %293 = vmatprep.subr.mxu0 0.0
    %294 = vmatpush1.msra.mxu0 0.0
    %295 = vmatprep.subr.mxu0 0.0
    %296 = vmatpush1.msra.mxu0 0.0
    %297 = vmatprep.subr.mxu0 0.0
    %298 = vmatpush1.msra.mxu0 0.0
    %299 = vmatprep.subr.mxu0 0.0
    %300 = vmatpush1.msra.mxu0 0.0
    %301 = vmatprep.subr.mxu0 0.0
    %302 = vmatpush1.msra.mxu0 0.0
    %303 = vmatprep.subr.mxu0 0.0
    %304 = vmatpush1.msra.mxu0 0.0
    %305 = vmatprep.subr.mxu0 0.0
    %306 = vmatpush1.msra.mxu0 0.0
    %307 = vmatprep.subr.mxu0 0.0
    %308 = vmatpush1.msra.mxu0 0.0
    %309 = vmatprep.subr.mxu0 0.0
    %310 = vmatpush1.msra.mxu0 0.0
    %311 = vmatprep.subr.mxu0 0.0
    %312 = vmatpush1.msra.mxu0 0.0
    %313 = vmatprep.subr.mxu0 0.0
    %314 = vmatpush1.msra.mxu0 %v273
    %315 = vmatprep.subr.mxu0 0.0
    %316 = vmatpush2.msra.mxu0 0.0
    %317 = vmatprep.subr.mxu0 0.0
    %318 = vmatpush2.msra.mxu0 0.0
    %319 = vmatprep.subr.mxu0 0.0
    %320 = vmatpush2.msra.mxu0 0.0
    %321 = vmatprep.subr.mxu0 0.0
    %322 = vmatpush2.msra.mxu0 0.0
    %323 = vmatprep.subr.mxu0 0.0
    %324 = vmatpush2.msra.mxu0 0.0
    %325 = vmatprep.subr.mxu0 0.0
    %326 = vmatpush2.msra.mxu0 0.0
    %327 = vmatprep.subr.mxu0 0.0
    %328 = vmatpush2.msra.mxu0 0.0
    %329 = vmatprep.subr.mxu0 0.0
    %330 = vmatpush2.msra.mxu0 0.0
    %331 = vmatprep.subr.mxu0 0.0
    %332 = vmatpush2.msra.mxu0 0.0
    %333 = vmatprep.subr.mxu0 0.0
    %334 = vmatpush2.msra.mxu0 0.0
    %335 = vmatprep.subr.mxu0 0.0
    %336 = vmatpush2.msra.mxu0 0.0
    %337 = vmatprep.subr.mxu0 0.0
    %338 = vmatpush2.msra.mxu0 0.0
    %339 = vmatprep.subr.mxu0 0.0
    %340 = vmatpush2.msra.mxu0 0.0
    %341 = vmatprep.subr.mxu0 0.0
    %342 = vmatpush2.msra.mxu0 0.0
    %343 = vmatprep.subr.mxu0 0.0
    %344 = vmatpush2.msra.mxu0 0.0
    %345 = vmatprep.subr.mxu0 0.0
    %346 = vmatpush2.msra.mxu0 0.0
    %347 = vmatprep.mubr.f32.mxu0 0.0
    %348 = vmatmul.mubr.f32.gmra.mxu0 %v281
    %v349 = vpop.f32.mrf.mxu0
    %v350 = vadd.f32 %v278, %v349
    %v351 = vpop.f32.mrf.mxu0
    %352 = vdwg.mxu0
    %v353 = vtanh.pop %v350
    %v355 = vrot.slane %v278, 1
    %vm357 = vcmask 261120
    %v359 = vsel %vm357, %v353, 0
    %361 = vmatprep.subr.mxu0 0.0
    %362 = vmatpush1.msra.mxu0 0.0
    %363 = vmatprep.subr.mxu0 0.0
    %364 = vmatpush1.msra.mxu0 0.0
    %365 = vmatprep.subr.mxu0 0.0
    %366 = vmatpush1.msra.mxu0 0.0
    %367 = vmatprep.subr.mxu0 0.0
    %368 = vmatpush1.msra.mxu0 0.0
    %369 = vmatprep.subr.mxu0 0.0
    %370 = vmatpush1.msra.mxu0 0.0
    %371 = vmatprep.subr.mxu0 0.0
    %372 = vmatpush1.msra.mxu0 0.0
    %373 = vmatprep.subr.mxu0 0.0
    %374 = vmatpush1.msra.mxu0 0.0
    %375 = vmatprep.subr.mxu0 0.0
    %376 = vmatpush1.msra.mxu0 0.0
    %377 = vmatprep.subr.mxu0 0.0
    %378 = vmatpush1.msra.mxu0 0.0
    %379 = vmatprep.subr.mxu0 0.0
    %380 = vmatpush1.msra.mxu0 0.0
    %381 = vmatprep.subr.mxu0 0.0
    %382 = vmatpush1.msra.mxu0 0.0
    %383 = vmatprep.subr.mxu0 0.0
    %384 = vmatpush1.msra.mxu0 0.0
    %385 = vmatprep.subr.mxu0 0.0
    %386 = vmatpush1.msra.mxu0 %v277
    %387 = vmatprep.subr.mxu0 0.0
    %388 = vmatpush1.msra.mxu0 %v276
    %389 = vmatprep.subr.mxu0 0.0
    %390 = vmatpush1.msra.mxu0 %v275
    %391 = vmatprep.subr.mxu0 0.0
    %392 = vmatpush1.msra.mxu0 %v274
    %393 = vmatprep.subr.mxu0 0.0
    %394 = vmatpush2.msra.mxu0 0.0
    %395 = vmatprep.subr.mxu0 0.0
    %396 = vmatpush2.msra.mxu0 0.0
    %397 = vmatprep.subr.mxu0 0.0
    %398 = vmatpush2.msra.mxu0 0.0
    %399 = vmatprep.subr.mxu0 0.0
    %400 = vmatpush2.msra.mxu0 0.0
    %401 = vmatprep.subr.mxu0 0.0
    %402 = vmatpush2.msra.mxu0 0.0
    %403 = vmatprep.subr.mxu0 0.0
    %404 = vmatpush2.msra.mxu0 0.0
    %405 = vmatprep.subr.mxu0 0.0
    %406 = vmatpush2.msra.mxu0 0.0
    %407 = vmatprep.subr.mxu0 0.0
    %408 = vmatpush2.msra.mxu0 0.0
    %409 = vmatprep.subr.mxu0 0.0
    %410 = vmatpush2.msra.mxu0 0.0
    %411 = vmatprep.subr.mxu0 0.0
    %412 = vmatpush2.msra.mxu0 0.0
    %413 = vmatprep.subr.mxu0 0.0
    %414 = vmatpush2.msra.mxu0 0.0
    %415 = vmatprep.subr.mxu0 0.0
    %416 = vmatpush2.msra.mxu0 0.0
    %417 = vmatprep.subr.mxu0 0.0
    %418 = vmatpush2.msra.mxu0 0.0
    %419 = vmatprep.subr.mxu0 0.0
    %420 = vmatpush2.msra.mxu0 0.0
    %421 = vmatprep.subr.mxu0 0.0
    %422 = vmatpush2.msra.mxu0 0.0
    %423 = vmatprep.subr.mxu0 0.0
    %424 = vmatpush2.msra.mxu0 0.0
    %425 = vmatprep.mubr.f32.mxu0 0.0
    %426 = vmatmul.mubr.f32.gmra.mxu0 %v359
    %v427 = vpop.f32.mrf.mxu0
    %v428 = vadd.f32 %v355, %v427
    %v429 = vpop.f32.mrf.mxu0
    %430 = vdwg.mxu0
    %v431 = vtanh.pop %v428
    %v432 = vrot.slane %v278, 2
    %v434 = vmul.f32 %v431, %v432
    %vm435 = vcmask 253952
    %v436 = vsel %vm435, %v434, 0.0
    %437 = vadd.xlane.f32.xlu0 %v436
    %v438 = vpop.xlane.xlu0 %437
    %v439 = vrot.slane %v278, 3
    %v441 = vadd.f32 %v438, %v439
    %vm442 = vcmask 0
    %443 = vst.msk [vmem:[#allocation2] sm:$0x1] %vm442, %v441
    // Predicated region
    $region22: #{graph_conv_pooling_forward.1} parent=1 // pred_check
      _
    $region23: #{graph_conv_pooling_forward.1} parent=1 // pred_check_branch
      %445 = sbr.rel (0) target = $region25
    $region24: #{graph_conv_pooling_forward.1} parent=1 // pred_region
      %s447 = ssub.s32 16, 16
      %448 = vsyncadd [#allocation3], %s447
      %s450 = sshll.u32 [#allocation2], 4
      %s451 = int_to_ptr.vmem [resolvable:$true] %s450
      %453 = dma.vmem_to_hbm [thread:$0]  %s451, 16, %s5, [#allocation3]
    $region25: #{graph_conv_pooling_forward.1} parent=1 // pred_fallthru
      _
    // Predicated region
    $region26: #{graph_conv_pooling_forward.1} parent=1 // pred_check
      _
    $region27: #{graph_conv_pooling_forward.1} parent=1 // pred_check_branch
      %455 = sbr.rel (0) target = $region29
    $region28: #{graph_conv_pooling_forward.1} parent=1 // pred_region
      %456 = dma.done [#allocation3], 16
    $region29: #{graph_conv_pooling_forward.1} parent=1 // pred_fallthru
      _
    %457 = vsyncpa [#allocation3], 1

</llo_original>
